<compile_context>
chip_gen: v5e
topology: v5e:2x2
jax: 0.10.0
libtpu: 0.0.40
codegen_flags: <defaults>
</compile_context>

<pallas_src>
import jax
import jax.numpy as jnp
from jax.experimental import pallas as pl
from jax.experimental.pallas import tpu as pltpu

NUM_OUT = 5   # fixed by the module (`num_out = 5`)
OUT_PAD = 8   # narrow zero-padded output width (full-array last dim -> legal block)


def _round_up(x, m):
    return ((x + m - 1) // m) * m


def _decoder_kernel(z_ref, w1_ref, b1_ref, w2h_ref, b2h_ref, out_ref):
    # fc1: [tile_b, z_dim] @ [z_dim, hidden] + [1, hidden]   (MXU)
    h = jnp.dot(z_ref[...], w1_ref[...], preferred_element_type=jnp.float32)
    h = h + b1_ref[...]
    # Softplus (torch.nn.Softplus default beta=1, threshold=20: x > 20 -> x,
    # otherwise log1p(exp(x)); clamp keeps exp() finite).
    h = jnp.where(h > 20.0, h, jnp.log1p(jnp.exp(jnp.minimum(h, 20.0))))
    # fc21 with the 0.5 sigmoid factor pre-folded into w2h/b2h:
    #   o = 0.5 * (h @ W2 + b2)   -> sigmoid(x) = 0.5*tanh(x/2) + 0.5
    o = jnp.dot(h, w2h_ref[...], preferred_element_type=jnp.float32)
    o = o + b2h_ref[...]
    # Sigmoid via tanh -> EUP slot instead of a VALU divide.
    out_ref[...] = 0.5 * jnp.tanh(o) + 0.5


def prepare_decoder_params(w1, b1, w2, b2):
    """One-time parameter prep (hoisted out of the per-call path):
    pads fc21 to OUT_PAD output lanes and folds the 0.5 of the tanh-based
    sigmoid into the padded weight/bias."""
    hidden_dim = w1.shape[1]
    w2h = jnp.zeros((hidden_dim, OUT_PAD), jnp.float32).at[:, :NUM_OUT].set(0.5 * w2)
    b2h = jnp.zeros((1, OUT_PAD), jnp.float32).at[:, :NUM_OUT].set(0.5 * b2)
    return w1, b1, w2h, b2h


def decoder_forward(z, params, *, tile_b=4096):
    """z: [B, z_dim]; params = prepare_decoder_params(...) -> [B, NUM_OUT] f32."""
    w1, b1, w2h, b2h = params
    B, z_dim = z.shape
    hidden_dim = w1.shape[1]

    # Pad the batch only to a multiple of 8 sublanes (cheap / usually a no-op);
    # the grid uses cdiv with a partial trailing block instead of tile-rounding.
    b_pad = _round_up(B, 8)
    zp = z if b_pad == B else jnp.pad(z, ((0, b_pad - B), (0, 0)))

    tile = min(_round_up(tile_b, 8), b_pad)
    # v7x: make sure the "parallel" batch axis has >= 2 steps so both
    # TensorCores run (no-op / harmless on v5e/v6e single-TC chips).
    if pl.cdiv(b_pad, tile) < 2 and b_pad >= 16:
        tile = _round_up(pl.cdiv(b_pad, 2), 8)
    grid = pl.cdiv(b_pad, tile)

    out_padded = pl.pallas_call(
        _decoder_kernel,
        out_shape=jax.ShapeDtypeStruct((b_pad, OUT_PAD), jnp.float32),
        grid=(grid,),
        in_specs=[
            pl.BlockSpec((tile, z_dim), lambda i: (i, 0)),            # z: tiled over batch
            pl.BlockSpec((z_dim, hidden_dim), lambda i: (0, 0)),      # w1: VMEM-resident
            pl.BlockSpec((1, hidden_dim), lambda i: (0, 0)),          # b1: VMEM-resident
            pl.BlockSpec((hidden_dim, OUT_PAD), lambda i: (0, 0)),    # 0.5*w2 (padded): resident
            pl.BlockSpec((1, OUT_PAD), lambda i: (0, 0)),             # 0.5*b2 (padded): resident
        ],
        out_specs=pl.BlockSpec((tile, OUT_PAD), lambda i: (i, 0)),
        compiler_params=pltpu.CompilerParams(
            dimension_semantics=("parallel",)),
    )(zp, w1, b1, w2h, b2h)

    return out_padded[:B, :NUM_OUT]


def init_params(key, z_dim, hidden_dim):
    """Deterministic synthetic params (same shapes as nn.Linear, weights
    stored transposed as [in, out])."""
    k1, k2, k3, k4 = jax.random.split(key, 4)
    w1 = jax.random.normal(k1, (z_dim, hidden_dim), jnp.float32) * 0.1
    b1 = jax.random.normal(k2, (1, hidden_dim), jnp.float32) * 0.1
    w2 = jax.random.normal(k3, (hidden_dim, NUM_OUT), jnp.float32) * 0.1
    b2 = jax.random.normal(k4, (1, NUM_OUT), jnp.float32) * 0.1
    return w1, b1, w2, b2


if __name__ == "__main__":
    key = jax.random.PRNGKey(0)
    B, z_dim, hidden_dim = 8, 16, 32

    kz, kp = jax.random.split(key)
    z = jax.random.normal(kz, (B, z_dim), jnp.float32)
    w1, b1, w2, b2 = init_params(kp, z_dim, hidden_dim)

    params = prepare_decoder_params(w1, b1, w2, b2)   # one-time prep
    out = decoder_forward(z, params)
    out = jax.block_until_ready(out)

    # Reference check in plain JAX (same math as the PyTorch module).
    h_ref = jax.nn.softplus(z @ w1 + b1)
    ref = jax.nn.sigmoid(h_ref @ w2 + b2)
    assert out.shape == (B, NUM_OUT)
    assert jnp.allclose(out, ref, atol=1e-5, rtol=1e-5)

    print("KERNEL_OK")
</pallas_src>

<mosaic_0001>
module attributes {stable_mosaic.version = 11 : i64} {
  func.func @_decoder_kernel(%arg0: i32, %arg1: memref<8x16xf32, #tpu.memory_space<vmem>>, %arg2: memref<16x32xf32, #tpu.memory_space<vmem>>, %arg3: memref<1x32xf32, #tpu.memory_space<vmem>>, %arg4: memref<32x8xf32, #tpu.memory_space<vmem>>, %arg5: memref<1x8xf32, #tpu.memory_space<vmem>>, %arg6: memref<8x8xf32, #tpu.memory_space<vmem>>) attributes {dimension_semantics = [#tpu.dimension_semantics<parallel>], iteration_bounds = array<i64: 1>, scalar_prefetch = 0 : i64, scratch_operands = 0 : i64, tpu.core_type = #tpu.core_type<tc>, window_params = [{transform_indices = @transform_0, window_bounds = array<i64: 8, 16>}, {pipeline_mode = #tpu.pipeline_mode<synchronous>, transform_indices = @transform_1, window_bounds = array<i64: 16, 32>}, {pipeline_mode = #tpu.pipeline_mode<synchronous>, transform_indices = @transform_2, window_bounds = array<i64: 1, 32>}, {pipeline_mode = #tpu.pipeline_mode<synchronous>, transform_indices = @transform_3, window_bounds = array<i64: 32, 8>}, {pipeline_mode = #tpu.pipeline_mode<synchronous>, transform_indices = @transform_4, window_bounds = array<i64: 1, 8>}, {transform_indices = @transform_5, window_bounds = array<i64: 8, 8>}]} {
    %c0 = arith.constant 0 : index
    %c0_0 = arith.constant 0 : index
    %0 = vector.load %arg1[%c0, %c0_0] : memref<8x16xf32, #tpu.memory_space<vmem>>, vector<8x16xf32>
    %c0_1 = arith.constant 0 : index
    %c0_2 = arith.constant 0 : index
    %1 = vector.load %arg2[%c0_1, %c0_2] : memref<16x32xf32, #tpu.memory_space<vmem>>, vector<16x32xf32>
    %cst = arith.constant dense<0.000000e+00> : vector<8x32xf32>
    %2 = tpu.matmul %0, %1, %cst {dimension_numbers = #tpu.dot_dimension_numbers<[1], [0], [0], [1], [0, 0, 1, 1], [], []>} : vector<8x16xf32>, vector<16x32xf32>, vector<8x32xf32> -> vector<8x32xf32>
    %c0_3 = arith.constant 0 : index
    %c0_4 = arith.constant 0 : index
    %3 = vector.load %arg3[%c0_3, %c0_4] : memref<1x32xf32, #tpu.memory_space<vmem>>, vector<1x32xf32>
    %4 = vector.broadcast %3 : vector<1x32xf32> to vector<8x32xf32>
    %5 = arith.addf %2, %4 : vector<8x32xf32>
    %cst_5 = arith.constant 2.000000e+01 : f32
    %6 = vector.broadcast %cst_5 : f32 to vector<8x32xf32>
    %7 = arith.cmpf ogt, %5, %6 : vector<8x32xf32>
    %cst_6 = arith.constant 2.000000e+01 : f32
    %8 = vector.broadcast %cst_6 : f32 to vector<8x32xf32>
    %9 = arith.minimumf %5, %8 : vector<8x32xf32>
    %10 = math.exp %9 : vector<8x32xf32>
    %11 = math.log1p %10 : vector<8x32xf32>
    %12 = arith.select %7, %5, %11 : vector<8x32xi1>, vector<8x32xf32>
    %c0_7 = arith.constant 0 : index
    %c0_8 = arith.constant 0 : index
    %13 = vector.load %arg4[%c0_7, %c0_8] : memref<32x8xf32, #tpu.memory_space<vmem>>, vector<32x8xf32>
    %cst_9 = arith.constant dense<0.000000e+00> : vector<8x8xf32>
    %14 = tpu.matmul %12, %13, %cst_9 {dimension_numbers = #tpu.dot_dimension_numbers<[1], [0], [0], [1], [0, 0, 1, 1], [], []>} : vector<8x32xf32>, vector<32x8xf32>, vector<8x8xf32> -> vector<8x8xf32>
    %c0_10 = arith.constant 0 : index
    %c0_11 = arith.constant 0 : index
    %15 = vector.load %arg5[%c0_10, %c0_11] : memref<1x8xf32, #tpu.memory_space<vmem>>, vector<1x8xf32>
    %16 = vector.broadcast %15 : vector<1x8xf32> to vector<8x8xf32>
    %17 = arith.addf %14, %16 : vector<8x8xf32>
    %18 = math.tanh %17 : vector<8x8xf32>
    %cst_12 = arith.constant 5.000000e-01 : f32
    %19 = vector.broadcast %cst_12 : f32 to vector<8x8xf32>
    %20 = arith.mulf %19, %18 : vector<8x8xf32>
    %cst_13 = arith.constant 5.000000e-01 : f32
    %21 = vector.broadcast %cst_13 : f32 to vector<8x8xf32>
    %22 = arith.addf %20, %21 : vector<8x8xf32>
    %c0_14 = arith.constant 0 : index
    %c0_15 = arith.constant 0 : index
    %23 = vector.load %arg6[%c0_14, %c0_15] : memref<8x8xf32, #tpu.memory_space<vmem>>, vector<8x8xf32>
    tpu.vector_store %arg6[%c0_14, %c0_15], %22 {strides = array<i32>} : memref<8x8xf32, #tpu.memory_space<vmem>>, vector<8x8xf32>,
    return
  }
  func.func @transform_0(%arg0: i32) -> (i32, i32) {
    %c0_i32 = arith.constant 0 : i32
    %c0_i32_0 = arith.constant 0 : i32
    return %arg0, %c0_i32 : i32, i32
  }
  func.func @transform_1(%arg0: i32) -> (i32, i32) {
    %c0_i32 = arith.constant 0 : i32
    %c0_i32_0 = arith.constant 0 : i32
    %c0_i32_1 = arith.constant 0 : i32
    return %c0_i32, %c0_i32_0 : i32, i32
  }
  func.func @transform_2(%arg0: i32) -> (i32, i32) {
    %c0_i32 = arith.constant 0 : i32
    %c0_i32_0 = arith.constant 0 : i32
    %c0_i32_1 = arith.constant 0 : i32
    return %c0_i32, %c0_i32_0 : i32, i32
  }
  func.func @transform_3(%arg0: i32) -> (i32, i32) {
    %c0_i32 = arith.constant 0 : i32
    %c0_i32_0 = arith.constant 0 : i32
    %c0_i32_1 = arith.constant 0 : i32
    return %c0_i32, %c0_i32_0 : i32, i32
  }
  func.func @transform_4(%arg0: i32) -> (i32, i32) {
    %c0_i32 = arith.constant 0 : i32
    %c0_i32_0 = arith.constant 0 : i32
    %c0_i32_1 = arith.constant 0 : i32
    return %c0_i32, %c0_i32_0 : i32, i32
  }
  func.func @transform_5(%arg0: i32) -> (i32, i32) {
    %c0_i32 = arith.constant 0 : i32
    %c0_i32_0 = arith.constant 0 : i32
    return %arg0, %c0_i32 : i32, i32
  }
}

</mosaic_0001>

<llo_original>
// kernel: tpu_custom_call.1
$region0: #{tpu_custom_call.1}
  #allocation0 [shape = 'u32[]', space=smem, size = 0x4, offset = 0x4, fixed_abs, tag = 'smem constant byte address 0x4 - core index']
  #allocation1 [shape = 'u32[72,128]{1,0:T(1,128)}', space=vmem, size = 0x9000, scoped, tag = 'internal scratch']
  %s0 = inlined_call_operand.vmem [shape: f32[8,16], index: 0, kind: input, shape index: {}]
  %s1 = inlined_call_operand.vmem [shape: f32[16,32], index: 1, kind: input, shape index: {}]
  %s2 = inlined_call_operand.vmem [shape: f32[1,32], index: 2, kind: input, shape index: {}]
  %s3 = inlined_call_operand.vmem [shape: f32[32,8], index: 3, kind: input, shape index: {}]
  %s4 = inlined_call_operand.vmem [shape: f32[1,8], index: 4, kind: input, shape index: {}]
  %s5 = inlined_call_operand.hbm [shape: f32[8,8], index: 5, kind: output, shape index: {}]
  %s6 = sld [smem:[#allocation0]]
  $region30: #{tpu_custom_call.1} parent=0
    _
  %s8 = ssub.s32 1, %s6
  %s9 = scalar_select 0, %s8, %s6
  $region1: #{tpu_custom_call.1} parent=0
    #allocation2 [shape = 'u8[4096]{0}', space=vmem, size = 0x1000, scoped, tag = 'output window, operand 0, single buffered']
    #allocation3 [shape = 's32[1]{0}', space=sflag, size = 0x4, scoped, tag = 'scoped memory for tpu_custom_call.1']
    %10 = vsyncpa [#allocation3], 0
    // Predicated region
    $region2: #{tpu_custom_call.1} parent=1 // pred_check
      _
    $region3: #{tpu_custom_call.1} parent=1 // pred_check_branch
      %12 = sbr.rel (0) target = $region5
    $region4: #{tpu_custom_call.1} parent=1 // pred_region
      _
    $region5: #{tpu_custom_call.1} parent=1 // pred_fallthru
      _
    // Predicated region
    $region6: #{tpu_custom_call.1} parent=1 // pred_check
      _
    $region7: #{tpu_custom_call.1} parent=1 // pred_check_branch
      %14 = sbr.rel (0) target = $region9
    $region8: #{tpu_custom_call.1} parent=1 // pred_region
      _
    $region9: #{tpu_custom_call.1} parent=1 // pred_fallthru
      _
    // Predicated region
    $region10: #{tpu_custom_call.1} parent=1 // pred_check
      _
    $region11: #{tpu_custom_call.1} parent=1 // pred_check_branch
      %16 = sbr.rel (0) target = $region13
    $region12: #{tpu_custom_call.1} parent=1 // pred_region
      _
    $region13: #{tpu_custom_call.1} parent=1 // pred_fallthru
      _
    // Predicated region
    $region14: #{tpu_custom_call.1} parent=1 // pred_check
      _
    $region15: #{tpu_custom_call.1} parent=1 // pred_check_branch
      %18 = sbr.rel (0) target = $region17
    $region16: #{tpu_custom_call.1} parent=1 // pred_region
      _
    $region17: #{tpu_custom_call.1} parent=1 // pred_fallthru
      _
    // Predicated region
    $region18: #{tpu_custom_call.1} parent=1 // pred_check
      _
    $region19: #{tpu_custom_call.1} parent=1 // pred_check_branch
      %20 = sbr.rel (0) target = $region21
    $region20: #{tpu_custom_call.1} parent=1 // pred_region
      _
    $region21: #{tpu_custom_call.1} parent=1 // pred_fallthru
      _
    %v21 = vld [vmem:[%s0] sm:$0xff]
    %v22 = vld [vmem:[%s1] sm:$0xff]
    %v23 = vld [vmem:[%s1 + $0x8] sm:$0xff]
    %v24 = vld [vmem:[%s2] sm:$0x1]
    %v26 = vperm.slane %v24, 0
    %vm28 = vcmask 130048
    %v30 = vsel %vm28, %v21, 0
    %32 = vmatpush.msra.mxu0 0.0
    %33 = vmatpush.msra.mxu0 0.0
    %34 = vmatpush.msra.mxu0 0.0
    %35 = vmatpush.msra.mxu0 0.0
    %36 = vmatpush.msra.mxu0 0.0
    %37 = vmatpush.msra.mxu0 0.0
    %38 = vmatpush.msra.mxu0 0.0
    %39 = vmatpush.msra.mxu0 0.0
    %40 = vmatpush.msra.mxu0 0.0
    %41 = vmatpush.msra.mxu0 0.0
    %42 = vmatpush.msra.mxu0 0.0
    %43 = vmatpush.msra.mxu0 0.0
    %44 = vmatpush.msra.mxu0 0.0
    %45 = vmatpush.msra.mxu0 0.0
    %46 = vmatpush.msra.mxu0 %v23
    %47 = vmatpush.msra.mxu0 %v22
    %48 = vmatmul.f32.gmra.mxu0 %v30
    %v49 = vpop.f32.mrf.mxu0
    %v50 = vadd.f32 %v26, %v49
    %51 = vdwg.mxu0
    %vm52 = vcmp.gt.f32.partialorder %v50, 20.0
    %v53 = vmin.f32 %v50, 20.0
    %v54 = vmul.f32 %v53, 1.442695
    %v55 = vpow.pop %v54
    %v56 = vadd.f32 %v55, 1.0
    %v57 = vlog2.pop %v56
    %v58 = vmul.f32 %v57, 0.6931472
    %v59 = vmul.f32 -0.5, %v55
    %v60 = vadd.f32 %v59, 1.0
    %v61 = vmul.f32 %v60, %v55
    %v62 = vand.u32 2147483647, %v55
    %vm63 = vcmp.lt.f32.partialorder %v62, 0.0004427343
    %v64 = vsel %vm63, %v61, %v58
    %v65 = vsel %vm52, %v50, %v64
    %v66 = vld [vmem:[%s3] sm:$0xff]
    %v67 = vld [vmem:[%s3 + $0x8] sm:$0xff]
    %v68 = vld [vmem:[%s3 + $0x10] sm:$0xff]
    %v69 = vld [vmem:[%s3 + $0x18] sm:$0xff]
    %v70 = vld [vmem:[%s4] sm:$0x1]
    %v72 = vperm.slane %v70, 0
    %vm74 = vcmask 261120
    %v76 = vsel %vm74, %v65, 0
    %78 = vmatpush.msra.mxu0 0.0
    %79 = vmatpush.msra.mxu0 0.0
    %80 = vmatpush.msra.mxu0 0.0
    %81 = vmatpush.msra.mxu0 0.0
    %82 = vmatpush.msra.mxu0 0.0
    %83 = vmatpush.msra.mxu0 0.0
    %84 = vmatpush.msra.mxu0 0.0
    %85 = vmatpush.msra.mxu0 0.0
    %86 = vmatpush.msra.mxu0 0.0
    %87 = vmatpush.msra.mxu0 0.0
    %88 = vmatpush.msra.mxu0 0.0
    %89 = vmatpush.msra.mxu0 0.0
    %90 = vmatpush.msra.mxu0 %v69
    %91 = vmatpush.msra.mxu0 %v68
    %92 = vmatpush.msra.mxu0 %v67
    %93 = vmatpush.msra.mxu0 %v66
    %94 = vmatmul.f32.gmra.mxu0 %v76
    %v95 = vpop.f32.mrf.mxu0
    %v96 = vadd.f32 %v72, %v95
    %97 = vdwg.mxu0
    %v98 = vtanh.pop %v96
    %v99 = vmul.f32 %v98, 0.5
    %v100 = vadd.f32 %v99, 0.5
    %vm101 = vcmask 64512
    %102 = vst.msk [vmem:[#allocation2] sm:$0xff] %vm101, %v100
    // Predicated region
    $region22: #{tpu_custom_call.1} parent=1 // pred_check
      _
    $region23: #{tpu_custom_call.1} parent=1 // pred_check_branch
      %104 = sbr.rel (0) target = $region25
    $region24: #{tpu_custom_call.1} parent=1 // pred_region
      %106 = vsyncadd [#allocation3], 0
      %s108 = sshll.u32 [#allocation2], 4
      %s109 = int_to_ptr.vmem [resolvable:$true] %s108
      %s110 = sshll.u32 %s5, 4
      %s111 = int_to_ptr.hbm [resolvable:$true] %s110
      %113 = dma.vmem_to_hbm [thread:$0]  %s109, 128, %s111, [#allocation3]
    $region25: #{tpu_custom_call.1} parent=1 // pred_fallthru
      _
    // Predicated region
    $region26: #{tpu_custom_call.1} parent=1 // pred_check
      _
    $region27: #{tpu_custom_call.1} parent=1 // pred_check_branch
      %115 = sbr.rel (0) target = $region29
    $region28: #{tpu_custom_call.1} parent=1 // pred_region
      %117 = dma.done [#allocation3], 128
    $region29: #{tpu_custom_call.1} parent=1 // pred_fallthru
      _
    %118 = vsyncpa [#allocation3], 1

</llo_original>
